<compile_context>
chip_gen: v7x
topology: tpu7x:2x2x1
jax: 0.10.0
libtpu: 0.0.40
codegen_flags: <defaults>
</compile_context>

<pallas_src>
import functools

import jax
import jax.numpy as jnp
from jax import lax
from jax.experimental import pallas as pl
from jax.experimental.pallas import tpu as pltpu


def alpha_loss_kernel(x_ref, t_ref, out_ref, acc_ref, *,
                      alpha_over_c, n_valid, col_tile, blocks_per_split):
    p = pl.program_id(0)          # split index ("parallel"; one per TensorCore)
    j = pl.program_id(1)          # column-block index within split ("arbitrary")

    @pl.when(j == 0)
    def _():
        acc_ref[...] = jnp.zeros_like(acc_ref)

    x = x_ref[...].astype(jnp.float32)        # (C, T) logits, classes on sublanes
    t = t_ref[...].astype(jnp.float32)        # (1, T) float targets (lane-dense)
    c, tt = x.shape

    cls = lax.broadcasted_iota(jnp.int32, (c, tt), 0)   # class id per sublane row
    t_int = t.astype(jnp.int32)                         # trunc toward 0 == .long()
    is_tgt = cls == t_int                               # (C, T) target-class mask

    # Per-sample cross entropy: logsumexp(x) - x[target].  All reductions are
    # over the C classes, i.e. plain axis-0 sublane reductions on lane-dense
    # (C, T) tensors.
    col_max = jnp.max(x, axis=0, keepdims=True)                         # (1, T)
    sum_e = jnp.sum(jnp.exp(x - col_max), axis=0, keepdims=True)        # (1, T)
    lse = jnp.log(sum_e) + col_max
    tgt_logit = jnp.max(jnp.where(is_tgt, x, -jnp.inf), axis=0, keepdims=True)
    values = lse - tgt_logit                                            # (1, T)

    # argmax over classes (first maximal index, matching torch.argmax).
    cls_f = cls.astype(jnp.float32)
    idx_cand = jnp.where(x >= col_max, cls_f, float(c))
    indices = jnp.min(idx_cand, axis=0, keepdims=True)                  # (1, T)

    weight = 1.0 + alpha_over_c * jnp.abs(indices - t)
    tmp = values * weight                                               # (1, T)

    # Mask samples past the real N: the ragged tail of the last block and any
    # clamped duplicate blocks.  select (not multiply) so garbage NaN/Inf in
    # out-of-bounds lanes cannot leak into the sum.
    col_start = (p * blocks_per_split + j) * col_tile
    col_ids = lax.broadcasted_iota(jnp.int32, (1, tt), 1) + col_start
    tmp = jnp.where(col_ids < n_valid, tmp, 0.0)

    # Single per-step reduce into a (1, 1) accumulator (no padded vector acc).
    acc_ref[...] += jnp.sum(tmp, keepdims=True)

    @pl.when(j == pl.num_programs(1) - 1)
    def _():
        out_ref[...] = acc_ref[...]            # (1, 1) partial sum of this split


def alpha_loss(batch, targets, alpha=1.0, *, block_bytes=2 << 20, num_splits=1):
    """Pallas implementation of AlphaLoss.forward(batch, targets).

    num_splits: independent partial sums along grid axis 0 ("parallel").
      Keep 1 on single-TensorCore parts (v5e/v6e); use 2 on v7x so each
      TensorCore takes half of the sample range.
    """
    n, c = batch.shape
    isize = jnp.dtype(batch.dtype).itemsize

    # Lane-dense layout: classes on sublanes, samples on the 128-wide lane
    # axis.  One streaming transpose pass in XLA; the targets reshape is free.
    # Logits stay in their native dtype on the wire (bf16 stays bf16); the f32
    # upcast happens on-chip.
    x_t = batch.T                                         # (C, N)
    tgt_row = targets.astype(jnp.float32).reshape(1, n)   # (1, N)

    # Column tile sized by bytes (~block_bytes of logits per block), multiple
    # of 128 lanes, and never absurdly larger than (the lane-padded) N.
    col_tile = max(128, (block_bytes // (c * isize)) // 128 * 128)
    col_tile = min(col_tile, ((n + 127) // 128) * 128)

    nb = pl.cdiv(n, col_tile)                   # real column blocks
    num_splits = max(1, min(num_splits, nb))    # never more splits than blocks
    bps = pl.cdiv(nb, num_splits)               # blocks per split (grid axis 1)

    def blk(p, j):
        # Clamp for DMA safety on duplicate tail blocks; the kernel masks them
        # out via the *intended* (unclamped) column offset.
        return jnp.minimum(p * bps + j, nb - 1)

    kernel = functools.partial(
        alpha_loss_kernel, alpha_over_c=float(alpha) / float(c),
        n_valid=n, col_tile=col_tile, blocks_per_split=bps)

    # VMEM budget: double-buffered logits + (8-sublane padded) target blocks,
    # plus headroom for the f32 intermediates of one block, so large tiles do
    # not trip the 16/32 MiB scoped-VMEM defaults and stay inside v7x's 64 MiB.
    logits_block = ((c + 7) // 8 * 8) * col_tile * isize
    target_block = 8 * col_tile * 4
    f32_block = c * col_tile * 4
    vmem_limit = int(min(2 * (logits_block + target_block)
                         + 6 * f32_block + (6 << 20), 64 << 20))

    cost = pl.CostEstimate(
        flops=12 * n * c,
        transcendentals=n * c + 2 * n,           # exp per logit, log per sample
        bytes_accessed=n * c * isize + n * 4 + num_splits * 4)

    partials = pl.pallas_call(
        kernel,
        out_shape=jax.ShapeDtypeStruct((num_splits, 1), jnp.float32),
        grid_spec=pltpu.PrefetchScalarGridSpec(
            num_scalar_prefetch=0,
            grid=(num_splits, bps),
            in_specs=[
                pl.BlockSpec((c, col_tile), lambda p, j: (0, blk(p, j))),
                pl.BlockSpec((1, col_tile), lambda p, j: (0, blk(p, j))),
            ],
            out_specs=pl.BlockSpec((1, 1), lambda p, j: (p, 0)),
            scratch_shapes=[pltpu.VMEM((1, 1), jnp.float32)],
        ),
        compiler_params=pltpu.CompilerParams(
            dimension_semantics=("parallel", "arbitrary"),
            vmem_limit_bytes=vmem_limit),
        cost_estimate=cost,
    )(x_t, tgt_row)

    return jnp.sum(partials) / float(n)


def alpha_loss_ref(batch, targets, alpha=1.0):
    """Plain-JAX reference mirroring the PyTorch module."""
    batch = batch.astype(jnp.float32)
    targets_f = targets.astype(jnp.float32)
    t_int = targets_f.astype(jnp.int32)
    logp = jax.nn.log_softmax(batch, axis=-1)
    values = -jnp.take_along_axis(logp, t_int[:, None], axis=-1)[:, 0]
    indices = jnp.argmax(batch, axis=-1).astype(jnp.float32)
    tmp = values * (1.0 + alpha * jnp.abs((indices - targets_f) / batch.shape[1]))
    return jnp.mean(tmp)


if __name__ == "__main__":
    key = jax.random.PRNGKey(0)
    k1, k2, k3, k4 = jax.random.split(key, 4)

    # Small shapes consistent with the module: N samples x C "age" classes.
    N, C = 10, 16
    batch = jax.random.normal(k1, (N, C), dtype=jnp.float32)
    targets = jax.random.randint(k2, (N,), 0, C).astype(jnp.float32)

    out = jax.block_until_ready(alpha_loss(batch, targets, alpha=1.0))
    ref = alpha_loss_ref(batch, targets, alpha=1.0)
    assert jnp.allclose(out, ref, atol=1e-5, rtol=1e-5), (out, ref)

    # Multi-block / multi-split path: tiny block_bytes forces a (2, 2) grid
    # with a ragged tail and a clamped duplicate block; bf16 logits are DMA'd
    # in their native dtype (upcast happens on-chip).
    N2, C2 = 300, 16
    batch2 = jax.random.normal(k3, (N2, C2), dtype=jnp.float32).astype(jnp.bfloat16)
    targets2 = jax.random.randint(k4, (N2,), 0, C2).astype(jnp.float32)

    out2 = jax.block_until_ready(
        alpha_loss(batch2, targets2, alpha=0.5,
                   block_bytes=128 * C2 * 2, num_splits=2))
    ref2 = alpha_loss_ref(batch2, targets2, alpha=0.5)
    assert jnp.allclose(out2, ref2, atol=1e-3, rtol=1e-3), (out2, ref2)

    print("KERNEL_OK")
</pallas_src>

<mosaic_0001>
module attributes {stable_mosaic.version = 11 : i64} {
  func.func @alpha_loss_kernel(%arg0: i32, %arg1: i32, %arg2: memref<16x128xf32, #tpu.memory_space<vmem>>, %arg3: memref<1x128xf32, #tpu.memory_space<vmem>>, %arg4: memref<1x1xf32, #tpu.memory_space<vmem>>, %arg5: memref<1x1xf32, #tpu.memory_space<vmem>>) attributes {dimension_semantics = [#tpu.dimension_semantics<parallel>, #tpu.dimension_semantics<arbitrary>], iteration_bounds = array<i64: 1, 1>, scalar_prefetch = 0 : i64, scratch_operands = 1 : i64, tpu.core_type = #tpu.core_type<tc>, window_params = [{transform_indices = @transform_0, window_bounds = array<i64: 16, 128>}, {transform_indices = @transform_1, window_bounds = array<i64: 1, 128>}, {transform_indices = @transform_2, window_bounds = array<i64: 1, 1>}]} {
    %c0_i32 = arith.constant 0 : i32
    %0 = arith.cmpi eq, %arg1, %c0_i32 : i32
    %1 = arith.extui %0 : i1 to i32
    %c0_i32_0 = arith.constant 0 : i32
    %2 = arith.cmpi ne, %1, %c0_i32_0 : i32
    scf.if %2 {
      %cst_19 = arith.constant 0.000000e+00 : f32
      %58 = vector.broadcast %cst_19 : f32 to vector<1x1xf32>
      %c0_20 = arith.constant 0 : index
      %c0_21 = arith.constant 0 : index
      %59 = vector.load %arg5[%c0_20, %c0_21] : memref<1x1xf32, #tpu.memory_space<vmem>>, vector<1x1xf32>
      tpu.vector_store %arg5[%c0_20, %c0_21], %58 {strides = array<i32>} : memref<1x1xf32, #tpu.memory_space<vmem>>, vector<1x1xf32>,
    } else {
    }
    %c0 = arith.constant 0 : index
    %c0_1 = arith.constant 0 : index
    %3 = vector.load %arg2[%c0, %c0_1] : memref<16x128xf32, #tpu.memory_space<vmem>>, vector<16x128xf32>
    %c0_2 = arith.constant 0 : index
    %c0_3 = arith.constant 0 : index
    %4 = vector.load %arg3[%c0_2, %c0_3] : memref<1x128xf32, #tpu.memory_space<vmem>>, vector<1x128xf32>
    %5 = tpu.iota {dimensions = array<i32: 0>} : vector<16x128xi32>
    %6 = arith.fptosi %4 : vector<1x128xf32> to vector<1x128xi32>
    %7 = vector.broadcast %6 : vector<1x128xi32> to vector<16x128xi32>
    %8 = arith.cmpi eq, %5, %7 : vector<16x128xi32>
    %cst = arith.constant dense<0xFF800000> : vector<128xf32>
    %9 = vector.multi_reduction <maximumf>, %3, %cst [0] : vector<16x128xf32> to vector<128xf32>
    %10 = vector.shape_cast %9 : vector<128xf32> to vector<1x128xf32>
    %11 = vector.broadcast %10 : vector<1x128xf32> to vector<16x128xf32>
    %12 = arith.subf %3, %11 : vector<16x128xf32>
    %13 = math.exp %12 : vector<16x128xf32>
    %cst_4 = arith.constant dense<0.000000e+00> : vector<128xf32>
    %14 = vector.multi_reduction <add>, %13, %cst_4 [0] : vector<16x128xf32> to vector<128xf32>
    %15 = vector.shape_cast %14 : vector<128xf32> to vector<1x128xf32>
    %16 = math.log %15 : vector<1x128xf32>
    %17 = arith.addf %16, %10 : vector<1x128xf32>
    %cst_5 = arith.constant 0xFF800000 : f32
    %18 = vector.broadcast %cst_5 : f32 to vector<16x128xf32>
    %19 = arith.select %8, %3, %18 : vector<16x128xi1>, vector<16x128xf32>
    %cst_6 = arith.constant dense<0xFF800000> : vector<128xf32>
    %20 = vector.multi_reduction <maximumf>, %19, %cst_6 [0] : vector<16x128xf32> to vector<128xf32>
    %21 = vector.shape_cast %20 : vector<128xf32> to vector<1x128xf32>
    %22 = arith.subf %17, %21 : vector<1x128xf32>
    %23 = arith.sitofp %5 : vector<16x128xi32> to vector<16x128xf32>
    %24 = vector.broadcast %10 : vector<1x128xf32> to vector<16x128xf32>
    %25 = arith.cmpf oge, %3, %24 : vector<16x128xf32>
    %cst_7 = arith.constant 1.600000e+01 : f32
    %26 = vector.broadcast %cst_7 : f32 to vector<16x128xf32>
    %27 = arith.select %25, %23, %26 : vector<16x128xi1>, vector<16x128xf32>
    %cst_8 = arith.constant dense<0x7F800000> : vector<128xf32>
    %28 = vector.multi_reduction <minimumf>, %27, %cst_8 [0] : vector<16x128xf32> to vector<128xf32>
    %29 = vector.shape_cast %28 : vector<128xf32> to vector<1x128xf32>
    %30 = arith.subf %29, %4 : vector<1x128xf32>
    %31 = math.absf %30 : vector<1x128xf32>
    %cst_9 = arith.constant 6.250000e-02 : f32
    %32 = vector.broadcast %cst_9 : f32 to vector<1x128xf32>
    %33 = arith.mulf %32, %31 : vector<1x128xf32>
    %cst_10 = arith.constant 1.000000e+00 : f32
    %34 = vector.broadcast %cst_10 : f32 to vector<1x128xf32>
    %35 = arith.addf %34, %33 : vector<1x128xf32>
    %36 = arith.mulf %22, %35 : vector<1x128xf32>
    %c1_i32 = arith.constant 1 : i32
    %37 = arith.muli %arg0, %c1_i32 : i32
    %38 = arith.addi %37, %arg1 : i32
    %c128_i32 = arith.constant 128 : i32
    %39 = arith.muli %38, %c128_i32 : i32
    %40 = tpu.iota {dimensions = array<i32: 1>} : vector<1x128xi32>
    %41 = vector.broadcast %39 : i32 to vector<1x128xi32>
    %42 = arith.addi %40, %41 : vector<1x128xi32>
    %c10_i32 = arith.constant 10 : i32
    %43 = vector.broadcast %c10_i32 : i32 to vector<1x128xi32>
    %44 = arith.cmpi slt, %42, %43 : vector<1x128xi32>
    %cst_11 = arith.constant 0.000000e+00 : f32
    %45 = vector.broadcast %cst_11 : f32 to vector<1x128xf32>
    %46 = arith.select %44, %36, %45 : vector<1x128xi1>, vector<1x128xf32>
    %c0_12 = arith.constant 0 : index
    %c0_13 = arith.constant 0 : index
    %47 = vector.load %arg5[%c0_12, %c0_13] : memref<1x1xf32, #tpu.memory_space<vmem>>, vector<1x1xf32>
    %48 = vector.shape_cast %46 : vector<1x128xf32> to vector<1x1x128xf32>
    %cst_14 = arith.constant dense<0.000000e+00> : vector<1xf32>
    %49 = vector.multi_reduction <add>, %48, %cst_14 [1, 2] : vector<1x1x128xf32> to vector<1xf32>
    %50 = vector.shape_cast %49 : vector<1xf32> to vector<1x1x1xf32>
    %51 = vector.extract %50[0, 0, 0] : f32 from vector<1x1x1xf32>
    %52 = vector.broadcast %51 : f32 to vector<1x1xf32>
    %53 = arith.addf %47, %52 : vector<1x1xf32>
    %c0_15 = arith.constant 0 : index
    %c0_16 = arith.constant 0 : index
    %54 = vector.load %arg5[%c0_15, %c0_16] : memref<1x1xf32, #tpu.memory_space<vmem>>, vector<1x1xf32>
    tpu.vector_store %arg5[%c0_15, %c0_16], %53 {strides = array<i32>} : memref<1x1xf32, #tpu.memory_space<vmem>>, vector<1x1xf32>,
    %c0_i32_17 = arith.constant 0 : i32
    %55 = arith.cmpi eq, %arg1, %c0_i32_17 : i32
    %56 = arith.extui %55 : i1 to i32
    %c0_i32_18 = arith.constant 0 : i32
    %57 = arith.cmpi ne, %56, %c0_i32_18 : i32
    scf.if %57 {
      %c0_19 = arith.constant 0 : index
      %c0_20 = arith.constant 0 : index
      %58 = vector.load %arg5[%c0_19, %c0_20] : memref<1x1xf32, #tpu.memory_space<vmem>>, vector<1x1xf32>
      %c0_21 = arith.constant 0 : index
      %c0_22 = arith.constant 0 : index
      %59 = vector.load %arg4[%c0_21, %c0_22] : memref<1x1xf32, #tpu.memory_space<vmem>>, vector<1x1xf32>
      tpu.vector_store %arg4[%c0_21, %c0_22], %58 {strides = array<i32>} : memref<1x1xf32, #tpu.memory_space<vmem>>, vector<1x1xf32>,
    } else {
    }
    return
  }
  func.func @transform_0(%arg0: i32, %arg1: i32) -> (i32, i32) {
    %c1_i32 = arith.constant 1 : i32
    %0 = arith.muli %arg0, %c1_i32 : i32
    %1 = arith.addi %0, %arg1 : i32
    %c0_i32 = arith.constant 0 : i32
    %2 = arith.minsi %1, %c0_i32 : i32
    %c0_i32_0 = arith.constant 0 : i32
    %c0_i32_1 = arith.constant 0 : i32
    return %c0_i32_0, %2 : i32, i32
  }
  func.func @transform_1(%arg0: i32, %arg1: i32) -> (i32, i32) {
    %c1_i32 = arith.constant 1 : i32
    %0 = arith.muli %arg0, %c1_i32 : i32
    %1 = arith.addi %0, %arg1 : i32
    %c0_i32 = arith.constant 0 : i32
    %2 = arith.minsi %1, %c0_i32 : i32
    %c0_i32_0 = arith.constant 0 : i32
    %c0_i32_1 = arith.constant 0 : i32
    return %c0_i32_0, %2 : i32, i32
  }
  func.func @transform_2(%arg0: i32, %arg1: i32) -> (i32, i32) {
    %c0_i32 = arith.constant 0 : i32
    %c0_i32_0 = arith.constant 0 : i32
    return %arg0, %c0_i32 : i32, i32
  }
}

</mosaic_0001>

<llo_original>
// kernel: tpu_custom_call.1
$region0: #{tpu_custom_call.1}
  #allocation0 [shape = 'u32[]', space=smem, size = 0x4, offset = 0x4, fixed_abs, tag = 'smem constant byte address 0x4 - core index']
  #allocation1 [shape = 'u32[144,128]{1,0:T(1,128)}', space=vmem, size = 0x12000, scoped, tag = 'internal scratch']
  #allocation2 [shape = 'f32[1,1]{1,0:T(1,128)}', space=vmem, size = 0x200, scoped, tag = 'scratch operand']
  %s0 = inlined_call_operand.hbm [shape: f32[16,10], index: 0, kind: input, shape index: {}]
  %s1 = inlined_call_operand.vmem [shape: f32[1,10], index: 1, kind: input, shape index: {}]
  %s2 = inlined_call_operand.hbm [shape: f32[1,1], index: 2, kind: output, shape index: {}]
  %s3 = sld [smem:[#allocation0]]
  $region30: #{tpu_custom_call.1} parent=0
    _
  %s5 = ssub.s32 1, %s3
  %s6 = scalar_select 0, %s5, %s3
  $region1: #{tpu_custom_call.1} parent=0
    #allocation3 [shape = 'u8[8192]{0}', space=vmem, size = 0x2000, scoped, tag = 'input window, operand 0, single buffered']
    #allocation4 [shape = 's32[1]{0}', space=sflag, size = 0x4, scoped, tag = 'scoped memory for tpu_custom_call.1']
    #allocation5 [shape = 's32[1]{0}', space=sflag, size = 0x4, scoped, tag = 'scoped memory for tpu_custom_call.1']
    #allocation6 [shape = 'u8[512]{0}', space=vmem, size = 0x400, scoped, tag = 'output window, operand 0, single buffered']
    %7 = vsyncpa [#allocation4], 0
    %8 = vsyncpa [#allocation5], 0
    // Predicated region
    $region2: #{tpu_custom_call.1} parent=1 // pred_check
      _
    $region3: #{tpu_custom_call.1} parent=1 // pred_check_branch
      %10 = sbr.rel (0) target = $region5
    $region4: #{tpu_custom_call.1} parent=1 // pred_region
      %s11 = sadd.s32 0, 0
      %p12 = scmp.lt.s32.totalorder %s11, 0
      %s13 = scalar_select %p12, %s11, 0
      %s15 = ssub.s32 256, 256
      %16 = vsyncadd [#allocation4], %s15
      %s17 = smul.addr %s13, 128
      %s18 = scalar_lea.hbm %s0, %s17
      %s19 = sshll.u32 [#allocation3], 4
      %s20 = int_to_ptr.vmem [resolvable:$true] %s19
      %25 = dma.hbm_to_vmem [thread:$0]  %s18, 256, %s20, [#allocation4], 128, 128, 8
    $region5: #{tpu_custom_call.1} parent=1 // pred_fallthru
      _
    // Predicated region
    $region6: #{tpu_custom_call.1} parent=1 // pred_check
      _
    $region7: #{tpu_custom_call.1} parent=1 // pred_check_branch
      %27 = sbr.rel (0) target = $region9
    $region8: #{tpu_custom_call.1} parent=1 // pred_region
      %s28 = sadd.s32 0, 0
      %p29 = scmp.lt.s32.totalorder %s28, 0
      %s30 = scalar_select %p29, %s28, 0
      %p31 = scmp.lt.s32.totalorder %s30, 0
      %s32 = scalar_select %p31, %s30, 0
      %s33 = scalar_lea.vmem %s1, %s32
      %s34 = sadd.s32 0, 0
      %p35 = scmp.lt.s32.totalorder %s34, 0
      %s36 = scalar_select %p35, %s34, 0
    $region9: #{tpu_custom_call.1} parent=1 // pred_fallthru
      _
    // Predicated region
    $region10: #{tpu_custom_call.1} parent=1 // pred_check
      _
    $region11: #{tpu_custom_call.1} parent=1 // pred_check_branch
      %38 = sbr.rel (0) target = $region13
    $region12: #{tpu_custom_call.1} parent=1 // pred_region
      %39 = dma.done [#allocation4], 256
    $region13: #{tpu_custom_call.1} parent=1 // pred_fallthru
      _
    %s40 = sadd.s32 0, 0
    %p41 = scmp.lt.s32.totalorder %s40, 0
    %s42 = scalar_select %p41, %s40, 0
    %p43 = scmp.lt.s32.totalorder %s42, 0
    %s44 = scalar_select %p43, %s42, 0
    %s45 = scalar_lea.vmem %s1, %s44
    %s46 = sadd.s32 0, 0
    %p47 = scmp.lt.s32.totalorder %s46, 0
    %s48 = scalar_select %p47, %s46, 0
    %s49 = sadd.s32 0, 0
    %p50 = scmp.lt.s32.totalorder %s49, 0
    %s51 = scalar_select %p50, %s49, 0
    %p52 = scmp.lt.s32.totalorder %s51, 0
    %s53 = scalar_select %p52, %s51, 0
    %s54 = scalar_lea.vmem %s1, %s53
    %s55 = sadd.s32 0, 0
    %p56 = scmp.lt.s32.totalorder %s55, 0
    %s57 = scalar_select %p56, %s55, 0
    %p58 = scmp.eq.s32.totalorder 0, 0
    // Predicated region
    $region14: #{tpu_custom_call.1} parent=1 // pred_check
      %p59 = pneg %p58
    $region15: #{tpu_custom_call.1} parent=1 // pred_check_branch
      %61 = sbr.rel (%p59) target = $region17
    $region16: #{tpu_custom_call.1} parent=1 // pred_region
      %vm62 = vcmask 0
      %63 = vst.msk [vmem:[#allocation2] sm:$0x1] %vm62, 0.0
    $region17: #{tpu_custom_call.1} parent=1 // pred_fallthru
      _
    %v64 = vld [vmem:[#allocation3] sm:$0xff]
    %v65 = vld [vmem:[#allocation3 + $0x8] sm:$0xff]
    %v66 = vld [vmem:[%s54] sm:$0x1]
    %v67 = vlaneseq
    %v68 = vshrl.u32 %v67, 7
    %v69 = vadd.s32 %v68, 8
    %v70 = vcvt.f32.s32.to.zero.pseudo %v66
    %v71 = vlaneseq
    %v72 = vshrl.u32 %v71, 7
    %v73 = vsub.s32 0, %v72
    %v74 = vrot.slane %v70, %v73
    %vm75 = vcmp.eq.s32.totalorder %v68, %v74
    %vm76 = vcmp.eq.s32.totalorder %v69, %v74
    %v77 = vmax.f32 %v64, %v65
    %v78 = vrot.slane %v77, 4
    %v79 = vmax.f32 %v77, %v78
    %v80 = vrot.slane %v79, 2
    %v81 = vmax.f32 %v79, %v80
    %v82 = vrot.slane %v81, 1
    %v83 = vmax.f32 %v81, %v82
    %v84 = vsub.f32 %v64, %v83
    %v85 = vsub.f32 %v65, %v83
    %v86 = vmul.f32 %v84, 1.442695
    %v87 = vpow.pop %v86
    %v88 = vmul.f32 %v85, 1.442695
    %v89 = vpow.pop %v88
    %v90 = vadd.f32 %v87, %v89
    %v91 = vrot.slane %v90, 4
    %v92 = vadd.f32 %v90, %v91
    %v93 = vrot.slane %v92, 2
    %v94 = vadd.f32 %v92, %v93
    %v95 = vrot.slane %v94, 1
    %v96 = vadd.f32 %v94, %v95
    %v97 = vlog2.pop %v96
    %v98 = vmul.f32 %v97, 0.6931472
    %v99 = vadd.f32 %v98, %v83
    %v100 = vsel %vm75, %v64, -inf
    %v101 = vsel %vm76, %v65, -inf
    %v102 = vmax.f32 %v100, %v101
    %v103 = vrot.slane %v102, 4
    %v104 = vmax.f32 %v102, %v103
    %v105 = vrot.slane %v104, 2
    %v106 = vmax.f32 %v104, %v105
    %v107 = vrot.slane %v106, 1
    %v108 = vmax.f32 %v106, %v107
    %v109 = vsub.f32 %v99, %v108
    %v110 = vcvt.s32.f32 %v68
    %v111 = vcvt.s32.f32 %v69
    %vm112 = vcmp.ge.f32.partialorder %v64, %v83
    %vm113 = vcmp.ge.f32.partialorder %v65, %v83
    %v114 = vsel %vm112, %v110, 16.0
    %v115 = vsel %vm113, %v111, 16.0
    %v116 = vmin.f32 %v114, %v115
    %v117 = vrot.slane %v116, 4
    %v118 = vmin.f32 %v116, %v117
    %v119 = vrot.slane %v118, 2
    %v120 = vmin.f32 %v118, %v119
    %v121 = vrot.slane %v120, 1
    %v122 = vmin.f32 %v120, %v121
    %v123 = vsub.f32 %v122, %v66
    %v124 = vand.u32 2147483647, %v123
    %v125 = vmul.f32 %v124, 0.0625
    %v126 = vadd.f32 %v125, 1.0
    %v127 = vmul.f32 %v109, %v126
    %s128 = sadd.s32 0, 0
    %s129 = smul.u32 %s128, 128
    %v130 = vlaneseq
    %v131 = vand.u32 %v130, 127
    %v132 = vstv %s129
    %v133 = vadd.s32 %v131, %v132
    %vm134 = vcmp.lt.s32.totalorder %v133, 10
    %v135 = vsel %vm134, %v127, 0.0
    %v136 = vld [vmem:[#allocation2] sm:$0x1]
    %vm137 = vcmask 1040384
    %v138 = vsel %vm137, %v135, 0.0
    %139 = vadd.xlane.f32.xlu0 %v138
    %v140 = vpop.xlane.xlu0 %139
    %v141 = vrot.slane %v140, 4
    %v142 = vadd.f32 %v140, %v141
    %v143 = vrot.slane %v142, 2
    %v144 = vadd.f32 %v142, %v143
    %v145 = vrot.slane %v144, 1
    %v146 = vadd.f32 %v144, %v145
    %s147 = vtos %v146
    %v148 = vstv %s147
    %v149 = vadd.f32 %v136, %v148
    %vm150 = vcmask 0
    %151 = vst.msk [vmem:[#allocation2] sm:$0x1] %vm150, %v149
    // Predicated region
    $region18: #{tpu_custom_call.1} parent=1 // pred_check
      %p152 = pneg %p58
    $region19: #{tpu_custom_call.1} parent=1 // pred_check_branch
      %154 = sbr.rel (%p152) target = $region21
    $region20: #{tpu_custom_call.1} parent=1 // pred_region
      %v155 = vld [vmem:[#allocation2] sm:$0x1]
      %156 = vst.msk [vmem:[#allocation6] sm:$0x1] %vm150, %v155
    $region21: #{tpu_custom_call.1} parent=1 // pred_fallthru
      _
    // Predicated region
    $region22: #{tpu_custom_call.1} parent=1 // pred_check
      _
    $region23: #{tpu_custom_call.1} parent=1 // pred_check_branch
      %158 = sbr.rel (0) target = $region25
    $region24: #{tpu_custom_call.1} parent=1 // pred_region
      %s160 = ssub.s32 16, 16
      %161 = vsyncadd [#allocation5], %s160
      %s163 = sshll.u32 [#allocation6], 4
      %s164 = int_to_ptr.vmem [resolvable:$true] %s163
      %166 = dma.vmem_to_hbm [thread:$0]  %s164, 16, %s2, [#allocation5]
    $region25: #{tpu_custom_call.1} parent=1 // pred_fallthru
      _
    // Predicated region
    $region26: #{tpu_custom_call.1} parent=1 // pred_check
      _
    $region27: #{tpu_custom_call.1} parent=1 // pred_check_branch
      %168 = sbr.rel (0) target = $region29
    $region28: #{tpu_custom_call.1} parent=1 // pred_region
      %169 = dma.done [#allocation5], 16
    $region29: #{tpu_custom_call.1} parent=1 // pred_fallthru
      _
    %170 = vsyncpa [#allocation4], 1
    %171 = vsyncpa [#allocation5], 1

</llo_original>
